<compile_context>
chip_gen: v7x
topology: tpu7x:2x2x1
jax: 0.10.0
libtpu: 0.0.40
codegen_flags: <defaults>
</compile_context>

<pallas_src>
import functools

import jax
import jax.numpy as jnp
from jax.experimental import pallas as pl
from jax.experimental.pallas import tpu as pltpu


def mlp_kernel(x_ref, w1_ref, b1_ref, w2_ref, b2_ref, o_ref):
    # h = relu(x @ w1 + b1): MXU matmul with f32 accumulation + VPU bias/relu.
    h = jnp.dot(x_ref[...], w1_ref[...], preferred_element_type=jnp.float32)
    h = jnp.maximum(h + b1_ref[...], 0.0)
    # out = h @ w2 + b2: second MXU pass, single lane-dense (128-wide) store.
    out = jnp.dot(h, w2_ref[...], preferred_element_type=jnp.float32) + b2_ref[...]
    o_ref[...] = out.astype(o_ref.dtype)


def _round_up(n, m):
    return ((n + m - 1) // m) * m


def _choose_tb(B, D, x_itemsize):
    """Batch tile: ~2 MiB of x per grid step, VMEM-safe on v7x, >=4 grid steps."""
    target_bytes = 2 << 20                              # ~2 MiB of x per step
    TB = max(512, target_bytes // max(1, D * x_itemsize))
    # Conservative VMEM budget (v7x has 64 MiB physical, 32 MiB default scoped):
    # 2x double-buffered x + 2x double-buffered out + resident weights.
    budget = 44 << 20
    w_bytes = D * 128 * 4 + 128 * 128 * 4 + 2 * 8 * 128 * 4
    per_row = 2 * D * x_itemsize + 2 * 128 * 4
    TB = min(TB, max(8, (budget - 2 * w_bytes) // per_row))
    # Keep >=4 grid steps when the batch allows it (v7x dual-TC + pipelining).
    TB = min(TB, max(8, _round_up(pl.cdiv(B, 4), 8)))
    TB = min(TB, _round_up(B, 8))
    TB = max(8, _round_up(TB, 8))                       # sublane-aligned
    if B < 8:
        TB = B                                          # full-dim block; rule waived
    return TB


@functools.partial(jax.jit, static_argnames=("tb", "bf16_inputs", "out_dtype"))
def simple_classifier(x, w1, b1, w2, b2, *, tb=None, bf16_inputs=None, out_dtype=None):
    """Forward pass of SimpleClassifier via a fused Pallas kernel.

    x: (B, D); w1: (D, 16); b1: (16,); w2: (16, C); b2: (C,).
    Returns (B, C). bf16_inputs=None -> auto (only when D is large); when on,
    x/w1 stream as bf16 with f32 MXU accumulation (small numerics delta).
    """
    B, D = x.shape
    H = w1.shape[1]
    C = w2.shape[1]
    H_pad = _round_up(max(H, 1), 128)                   # 16  -> 128
    C_pad = _round_up(max(C, 1), 128)                   # C   -> 128 (lane-dense store)

    if bf16_inputs is None:
        bf16_inputs = D >= 512                          # x traffic dominates only then
    if out_dtype is None:
        out_dtype = x.dtype

    # Pad only the tiny weights/biases; x streams unpadded.
    w1_p = jnp.pad(w1, ((0, 0), (0, H_pad - H)))
    b1_p = jnp.pad(b1.reshape(1, H), ((0, 0), (0, H_pad - H)))
    w2_p = jnp.pad(w2, ((0, H_pad - H), (0, C_pad - C)))
    b2_p = jnp.pad(b2.reshape(1, C), ((0, 0), (0, C_pad - C)))

    x_s = x
    if bf16_inputs:
        x_s = x.astype(jnp.bfloat16)
        w1_p = w1_p.astype(jnp.bfloat16)

    x_itemsize = jnp.dtype(x_s.dtype).itemsize
    out_itemsize = jnp.dtype(out_dtype).itemsize
    TB = _choose_tb(B, D, x_itemsize) if tb is None else int(tb)
    grid = (pl.cdiv(B, TB),)                            # no batch padding

    # Explicit VMEM budget (matters on v7x 64 MiB / v5e 16 MiB default scoped).
    vmem_est = (2 * TB * D * x_itemsize                 # x, double-buffered
                + 2 * TB * C_pad * out_itemsize         # out, double-buffered
                + D * H_pad * jnp.dtype(w1_p.dtype).itemsize   # w1, single buffer
                + H_pad * C_pad * 4                     # w2
                + 2 * 8 * 128 * 4)                      # biases (padded tiles)
    vmem_limit = int(min(max(vmem_est + (4 << 20), 32 << 20), 48 << 20))

    resident = dict(pipeline_mode=pl.Buffered(1))       # constant blocks: no double-buffer

    out_p = pl.pallas_call(
        mlp_kernel,
        out_shape=jax.ShapeDtypeStruct((B, C_pad), out_dtype),
        grid=grid,
        in_specs=[
            # x streams over the batch grid axis (double-buffered by Pallas).
            pl.BlockSpec((TB, D), lambda i: (i, 0)),
            # Weights / biases: constant index_map -> resident in VMEM.
            pl.BlockSpec((D, H_pad), lambda i: (0, 0), **resident),
            pl.BlockSpec((1, H_pad), lambda i: (0, 0), **resident),
            pl.BlockSpec((H_pad, C_pad), lambda i: (0, 0), **resident),
            pl.BlockSpec((1, C_pad), lambda i: (0, 0), **resident),
        ],
        out_specs=pl.BlockSpec((TB, C_pad), lambda i: (i, 0)),
        compiler_params=pltpu.CompilerParams(
            dimension_semantics=("parallel",),
            vmem_limit_bytes=vmem_limit),
    )(x_s, w1_p, b1_p, w2_p, b2_p)

    # Strip class-lane padding (batch was never padded).
    return out_p[:, :C]


def init_params(key, input_dim, num_classes, hidden=16):
    # torch.nn.Linear default init: U(-1/sqrt(fan_in), 1/sqrt(fan_in)).
    k1, k2, k3, k4 = jax.random.split(key, 4)
    bound1 = 1.0 / jnp.sqrt(jnp.float32(input_dim))
    bound2 = 1.0 / jnp.sqrt(jnp.float32(hidden))
    w1 = jax.random.uniform(k1, (input_dim, hidden), jnp.float32, -bound1, bound1)
    b1 = jax.random.uniform(k2, (hidden,), jnp.float32, -bound1, bound1)
    w2 = jax.random.uniform(k3, (hidden, num_classes), jnp.float32, -bound2, bound2)
    b2 = jax.random.uniform(k4, (num_classes,), jnp.float32, -bound2, bound2)
    return w1, b1, w2, b2


if __name__ == "__main__":
    key = jax.random.PRNGKey(0)
    kx, kp = jax.random.split(key)

    batch, input_dim, num_classes = 8, 32, 4
    x = jax.random.normal(kx, (batch, input_dim), jnp.float32)
    w1, b1, w2, b2 = init_params(kp, input_dim, num_classes)

    out = simple_classifier(x, w1, b1, w2, b2)
    jax.block_until_ready(out)
    assert out.shape == (batch, num_classes)

    # Pure-JAX reference (HIGHEST precision so the f32 MXU path is compared
    # against a full-precision f32 matmul, not XLA's default fast path).
    hp = jax.lax.Precision.HIGHEST
    ref = jnp.maximum(jnp.dot(x, w1, precision=hp) + b1, 0.0)
    ref = jnp.dot(ref, w2, precision=hp) + b2
    assert jnp.allclose(out, ref, atol=1e-4, rtol=1e-4), "mismatch vs reference"

    print("KERNEL_OK")
</pallas_src>

<mosaic_0001>
module attributes {stable_mosaic.version = 11 : i64} {
  func.func @mlp_kernel(%arg0: i32, %arg1: memref<8x32xf32, #tpu.memory_space<vmem>>, %arg2: memref<32x128xf32, #tpu.memory_space<vmem>>, %arg3: memref<1x128xf32, #tpu.memory_space<vmem>>, %arg4: memref<128x128xf32, #tpu.memory_space<vmem>>, %arg5: memref<1x128xf32, #tpu.memory_space<vmem>>, %arg6: memref<8x128xf32, #tpu.memory_space<vmem>>) attributes {dimension_semantics = [#tpu.dimension_semantics<parallel>], iteration_bounds = array<i64: 1>, scalar_prefetch = 0 : i64, scratch_operands = 0 : i64, tpu.core_type = #tpu.core_type<tc>, window_params = [{transform_indices = @transform_0, window_bounds = array<i64: 8, 32>}, {pipeline_mode = #tpu.pipeline_mode<synchronous>, transform_indices = @transform_1, window_bounds = array<i64: 32, 128>}, {pipeline_mode = #tpu.pipeline_mode<synchronous>, transform_indices = @transform_2, window_bounds = array<i64: 1, 128>}, {pipeline_mode = #tpu.pipeline_mode<synchronous>, transform_indices = @transform_3, window_bounds = array<i64: 128, 128>}, {pipeline_mode = #tpu.pipeline_mode<synchronous>, transform_indices = @transform_4, window_bounds = array<i64: 1, 128>}, {transform_indices = @transform_5, window_bounds = array<i64: 8, 128>}]} {
    %c0 = arith.constant 0 : index
    %c0_0 = arith.constant 0 : index
    %0 = vector.load %arg1[%c0, %c0_0] : memref<8x32xf32, #tpu.memory_space<vmem>>, vector<8x32xf32>
    %c0_1 = arith.constant 0 : index
    %c0_2 = arith.constant 0 : index
    %1 = vector.load %arg2[%c0_1, %c0_2] : memref<32x128xf32, #tpu.memory_space<vmem>>, vector<32x128xf32>
    %cst = arith.constant dense<0.000000e+00> : vector<8x128xf32>
    %2 = tpu.matmul %0, %1, %cst {dimension_numbers = #tpu.dot_dimension_numbers<[1], [0], [0], [1], [0, 0, 1, 1], [], []>} : vector<8x32xf32>, vector<32x128xf32>, vector<8x128xf32> -> vector<8x128xf32>
    %c0_3 = arith.constant 0 : index
    %c0_4 = arith.constant 0 : index
    %3 = vector.load %arg3[%c0_3, %c0_4] : memref<1x128xf32, #tpu.memory_space<vmem>>, vector<1x128xf32>
    %4 = vector.broadcast %3 : vector<1x128xf32> to vector<8x128xf32>
    %5 = arith.addf %2, %4 : vector<8x128xf32>
    %cst_5 = arith.constant 0.000000e+00 : f32
    %6 = vector.broadcast %cst_5 : f32 to vector<8x128xf32>
    %7 = arith.maximumf %5, %6 : vector<8x128xf32>
    %c0_6 = arith.constant 0 : index
    %c0_7 = arith.constant 0 : index
    %8 = vector.load %arg4[%c0_6, %c0_7] : memref<128x128xf32, #tpu.memory_space<vmem>>, vector<128x128xf32>
    %cst_8 = arith.constant dense<0.000000e+00> : vector<8x128xf32>
    %9 = tpu.matmul %7, %8, %cst_8 {dimension_numbers = #tpu.dot_dimension_numbers<[1], [0], [0], [1], [0, 0, 1, 1], [], []>} : vector<8x128xf32>, vector<128x128xf32>, vector<8x128xf32> -> vector<8x128xf32>
    %c0_9 = arith.constant 0 : index
    %c0_10 = arith.constant 0 : index
    %10 = vector.load %arg5[%c0_9, %c0_10] : memref<1x128xf32, #tpu.memory_space<vmem>>, vector<1x128xf32>
    %11 = vector.broadcast %10 : vector<1x128xf32> to vector<8x128xf32>
    %12 = arith.addf %9, %11 : vector<8x128xf32>
    %c0_11 = arith.constant 0 : index
    %c0_12 = arith.constant 0 : index
    %13 = vector.load %arg6[%c0_11, %c0_12] : memref<8x128xf32, #tpu.memory_space<vmem>>, vector<8x128xf32>
    tpu.vector_store %arg6[%c0_11, %c0_12], %12 {strides = array<i32>} : memref<8x128xf32, #tpu.memory_space<vmem>>, vector<8x128xf32>,
    return
  }
  func.func @transform_0(%arg0: i32) -> (i32, i32) {
    %c0_i32 = arith.constant 0 : i32
    %c0_i32_0 = arith.constant 0 : i32
    return %arg0, %c0_i32 : i32, i32
  }
  func.func @transform_1(%arg0: i32) -> (i32, i32) {
    %c0_i32 = arith.constant 0 : i32
    %c0_i32_0 = arith.constant 0 : i32
    %c0_i32_1 = arith.constant 0 : i32
    return %c0_i32, %c0_i32_0 : i32, i32
  }
  func.func @transform_2(%arg0: i32) -> (i32, i32) {
    %c0_i32 = arith.constant 0 : i32
    %c0_i32_0 = arith.constant 0 : i32
    %c0_i32_1 = arith.constant 0 : i32
    return %c0_i32, %c0_i32_0 : i32, i32
  }
  func.func @transform_3(%arg0: i32) -> (i32, i32) {
    %c0_i32 = arith.constant 0 : i32
    %c0_i32_0 = arith.constant 0 : i32
    %c0_i32_1 = arith.constant 0 : i32
    return %c0_i32, %c0_i32_0 : i32, i32
  }
  func.func @transform_4(%arg0: i32) -> (i32, i32) {
    %c0_i32 = arith.constant 0 : i32
    %c0_i32_0 = arith.constant 0 : i32
    %c0_i32_1 = arith.constant 0 : i32
    return %c0_i32, %c0_i32_0 : i32, i32
  }
  func.func @transform_5(%arg0: i32) -> (i32, i32) {
    %c0_i32 = arith.constant 0 : i32
    %c0_i32_0 = arith.constant 0 : i32
    return %arg0, %c0_i32 : i32, i32
  }
}

</mosaic_0001>

<llo_original>
// kernel: simple_classifier.1
$region0: #{simple_classifier.1}
  #allocation0 [shape = 'u32[]', space=smem, size = 0x4, offset = 0x4, fixed_abs, tag = 'smem constant byte address 0x4 - core index']
  #allocation1 [shape = 'u32[144,128]{1,0:T(1,128)}', space=vmem, size = 0x12000, scoped, tag = 'internal scratch']
  %s0 = inlined_call_operand.vmem [shape: f32[8,32], index: 0, kind: input, shape index: {}]
  %s1 = inlined_call_operand.vmem [shape: f32[32,128], index: 1, kind: input, shape index: {}]
  %s2 = inlined_call_operand.vmem [shape: f32[1,128], index: 2, kind: input, shape index: {}]
  %s3 = inlined_call_operand.vmem [shape: f32[128,128], index: 3, kind: input, shape index: {}]
  %s4 = inlined_call_operand.vmem [shape: f32[1,128], index: 4, kind: input, shape index: {}]
  %s5 = inlined_call_operand.vmem [shape: f32[8,128], index: 5, kind: output, shape index: {}]
  %s6 = sld [smem:[#allocation0]]
  $region30: #{simple_classifier.1} parent=0
    _
  %s8 = ssub.s32 1, %s6
  %s9 = scalar_select 0, %s8, %s6
  // Predicated region
  $region2: #{simple_classifier.1} parent=0 // pred_check
    _
  $region3: #{simple_classifier.1} parent=0 // pred_check_branch
    %11 = sbr.rel (0) target = $region5
  $region4: #{simple_classifier.1} parent=0 // pred_region
    _
  $region5: #{simple_classifier.1} parent=0 // pred_fallthru
    _
  // Predicated region
  $region6: #{simple_classifier.1} parent=0 // pred_check
    _
  $region7: #{simple_classifier.1} parent=0 // pred_check_branch
    %13 = sbr.rel (0) target = $region9
  $region8: #{simple_classifier.1} parent=0 // pred_region
    _
  $region9: #{simple_classifier.1} parent=0 // pred_fallthru
    _
  // Predicated region
  $region10: #{simple_classifier.1} parent=0 // pred_check
    _
  $region11: #{simple_classifier.1} parent=0 // pred_check_branch
    %15 = sbr.rel (0) target = $region13
  $region12: #{simple_classifier.1} parent=0 // pred_region
    _
  $region13: #{simple_classifier.1} parent=0 // pred_fallthru
    _
  // Predicated region
  $region14: #{simple_classifier.1} parent=0 // pred_check
    _
  $region15: #{simple_classifier.1} parent=0 // pred_check_branch
    %17 = sbr.rel (0) target = $region17
  $region16: #{simple_classifier.1} parent=0 // pred_region
    _
  $region17: #{simple_classifier.1} parent=0 // pred_fallthru
    _
  // Predicated region
  $region18: #{simple_classifier.1} parent=0 // pred_check
    _
  $region19: #{simple_classifier.1} parent=0 // pred_check_branch
    %19 = sbr.rel (0) target = $region21
  $region20: #{simple_classifier.1} parent=0 // pred_region
    _
  $region21: #{simple_classifier.1} parent=0 // pred_fallthru
    _
  %v20 = vld [vmem:[%s0] sm:$0xff]
  %v21 = vld [vmem:[%s1] sm:$0xff]
  %v22 = vld [vmem:[%s1 + $0x8] sm:$0xff]
  %v23 = vld [vmem:[%s1 + $0x10] sm:$0xff]
  %v24 = vld [vmem:[%s1 + $0x18] sm:$0xff]
  %v25 = vld [vmem:[%s2] sm:$0x1]
  %v27 = vlaneseq
  %v28 = vshrl.u32 %v27, 7
  %v29 = vsub.s32 0, %v28
  %v30 = vrot.slane %v25, %v29
  %vm32 = vcmask 261120
  %v34 = vsel %vm32, %v20, 0
  %36 = vmatprep.subr.mxu0 0.0
  %37 = vmatpush1.msra.mxu0 %v21
  %38 = vmatprep.subr.mxu0 0.0
  %39 = vmatpush1.msra.mxu0 %v22
  %40 = vmatprep.subr.mxu0 0.0
  %41 = vmatpush1.msra.mxu0 %v23
  %42 = vmatprep.subr.mxu0 0.0
  %43 = vmatpush1.msra.mxu0 %v24
  %44 = vmatprep.subr.mxu0 0.0
  %45 = vmatpush1.msra.mxu0 0.0
  %46 = vmatprep.subr.mxu0 0.0
  %47 = vmatpush1.msra.mxu0 0.0
  %48 = vmatprep.subr.mxu0 0.0
  %49 = vmatpush1.msra.mxu0 0.0
  %50 = vmatprep.subr.mxu0 0.0
  %51 = vmatpush1.msra.mxu0 0.0
  %52 = vmatprep.subr.mxu0 0.0
  %53 = vmatpush1.msra.mxu0 0.0
  %54 = vmatprep.subr.mxu0 0.0
  %55 = vmatpush1.msra.mxu0 0.0
  %56 = vmatprep.subr.mxu0 0.0
  %57 = vmatpush1.msra.mxu0 0.0
  %58 = vmatprep.subr.mxu0 0.0
  %59 = vmatpush1.msra.mxu0 0.0
  %60 = vmatprep.subr.mxu0 0.0
  %61 = vmatpush1.msra.mxu0 0.0
  %62 = vmatprep.subr.mxu0 0.0
  %63 = vmatpush1.msra.mxu0 0.0
  %64 = vmatprep.subr.mxu0 0.0
  %65 = vmatpush1.msra.mxu0 0.0
  %66 = vmatprep.subr.mxu0 0.0
  %67 = vmatpush1.msra.mxu0 0.0
  %68 = vmatprep.subr.mxu0 0.0
  %69 = vmatpush1.msra.mxu0 0.0
  %70 = vmatprep.subr.mxu0 0.0
  %71 = vmatpush1.msra.mxu0 0.0
  %72 = vmatprep.subr.mxu0 0.0
  %73 = vmatpush1.msra.mxu0 0.0
  %74 = vmatprep.subr.mxu0 0.0
  %75 = vmatpush1.msra.mxu0 0.0
  %76 = vmatprep.subr.mxu0 0.0
  %77 = vmatpush1.msra.mxu0 0.0
  %78 = vmatprep.subr.mxu0 0.0
  %79 = vmatpush1.msra.mxu0 0.0
  %80 = vmatprep.subr.mxu0 0.0
  %81 = vmatpush1.msra.mxu0 0.0
  %82 = vmatprep.subr.mxu0 0.0
  %83 = vmatpush1.msra.mxu0 0.0
  %84 = vmatprep.subr.mxu0 0.0
  %85 = vmatpush1.msra.mxu0 0.0
  %86 = vmatprep.subr.mxu0 0.0
  %87 = vmatpush1.msra.mxu0 0.0
  %88 = vmatprep.subr.mxu0 0.0
  %89 = vmatpush1.msra.mxu0 0.0
  %90 = vmatprep.subr.mxu0 0.0
  %91 = vmatpush1.msra.mxu0 0.0
  %92 = vmatprep.subr.mxu0 0.0
  %93 = vmatpush1.msra.mxu0 0.0
  %94 = vmatprep.subr.mxu0 0.0
  %95 = vmatpush1.msra.mxu0 0.0
  %96 = vmatprep.subr.mxu0 0.0
  %97 = vmatpush1.msra.mxu0 0.0
  %98 = vmatprep.subr.mxu0 0.0
  %99 = vmatpush1.msra.mxu0 0.0
  %100 = vmatprep.mubr.f32.mxu0 0.0
  %101 = vmatmul.mubr.f32.gmra.mrb[0].mxu0 %v34
  %v102 = vpop.f32.mrb[0].mxu0
  %v103 = vadd.f32 %v30, %v102
  %v104 = vpop.f32.mrb[0].mxu0
  %105 = vdwg.mxu0
  %v106 = vmax.f32 %v103, 0.0
  %v107 = vld [vmem:[%s3] sm:$0xff]
  %v108 = vld [vmem:[%s3 + $0x8] sm:$0xff]
  %v109 = vld [vmem:[%s3 + $0x10] sm:$0xff]
  %v110 = vld [vmem:[%s3 + $0x18] sm:$0xff]
  %v111 = vld [vmem:[%s3 + $0x20] sm:$0xff]
  %v112 = vld [vmem:[%s3 + $0x28] sm:$0xff]
  %v113 = vld [vmem:[%s3 + $0x30] sm:$0xff]
  %v114 = vld [vmem:[%s3 + $0x38] sm:$0xff]
  %v115 = vld [vmem:[%s3 + $0x40] sm:$0xff]
  %v116 = vld [vmem:[%s3 + $0x48] sm:$0xff]
  %v117 = vld [vmem:[%s3 + $0x50] sm:$0xff]
  %v118 = vld [vmem:[%s3 + $0x58] sm:$0xff]
  %v119 = vld [vmem:[%s3 + $0x60] sm:$0xff]
  %v120 = vld [vmem:[%s3 + $0x68] sm:$0xff]
  %v121 = vld [vmem:[%s3 + $0x70] sm:$0xff]
  %v122 = vld [vmem:[%s3 + $0x78] sm:$0xff]
  %v123 = vld [vmem:[%s4] sm:$0x1]
  %v125 = vlaneseq
  %v126 = vshrl.u32 %v125, 7
  %v127 = vsub.s32 0, %v126
  %v128 = vrot.slane %v123, %v127
  %130 = vmatprep.subr.mxu0 0.0
  %131 = vmatpush1.msra.mxu0 %v107
  %132 = vmatprep.subr.mxu0 0.0
  %133 = vmatpush1.msra.mxu0 %v108
  %134 = vmatprep.subr.mxu0 0.0
  %135 = vmatpush1.msra.mxu0 %v109
  %136 = vmatprep.subr.mxu0 0.0
  %137 = vmatpush1.msra.mxu0 %v110
  %138 = vmatprep.subr.mxu0 0.0
  %139 = vmatpush1.msra.mxu0 %v111
  %140 = vmatprep.subr.mxu0 0.0
  %141 = vmatpush1.msra.mxu0 %v112
  %142 = vmatprep.subr.mxu0 0.0
  %143 = vmatpush1.msra.mxu0 %v113
  %144 = vmatprep.subr.mxu0 0.0
  %145 = vmatpush1.msra.mxu0 %v114
  %146 = vmatprep.subr.mxu0 0.0
  %147 = vmatpush1.msra.mxu0 %v115
  %148 = vmatprep.subr.mxu0 0.0
  %149 = vmatpush1.msra.mxu0 %v116
  %150 = vmatprep.subr.mxu0 0.0
  %151 = vmatpush1.msra.mxu0 %v117
  %152 = vmatprep.subr.mxu0 0.0
  %153 = vmatpush1.msra.mxu0 %v118
  %154 = vmatprep.subr.mxu0 0.0
  %155 = vmatpush1.msra.mxu0 %v119
  %156 = vmatprep.subr.mxu0 0.0
  %157 = vmatpush1.msra.mxu0 %v120
  %158 = vmatprep.subr.mxu0 0.0
  %159 = vmatpush1.msra.mxu0 %v121
  %160 = vmatprep.subr.mxu0 0.0
  %161 = vmatpush1.msra.mxu0 %v122
  %162 = vmatprep.subr.mxu0 0.0
  %163 = vmatpush1.msra.mxu0 0.0
  %164 = vmatprep.subr.mxu0 0.0
  %165 = vmatpush1.msra.mxu0 0.0
  %166 = vmatprep.subr.mxu0 0.0
  %167 = vmatpush1.msra.mxu0 0.0
  %168 = vmatprep.subr.mxu0 0.0
  %169 = vmatpush1.msra.mxu0 0.0
  %170 = vmatprep.subr.mxu0 0.0
  %171 = vmatpush1.msra.mxu0 0.0
  %172 = vmatprep.subr.mxu0 0.0
  %173 = vmatpush1.msra.mxu0 0.0
  %174 = vmatprep.subr.mxu0 0.0
  %175 = vmatpush1.msra.mxu0 0.0
  %176 = vmatprep.subr.mxu0 0.0
  %177 = vmatpush1.msra.mxu0 0.0
  %178 = vmatprep.subr.mxu0 0.0
  %179 = vmatpush1.msra.mxu0 0.0
  %180 = vmatprep.subr.mxu0 0.0
  %181 = vmatpush1.msra.mxu0 0.0
  %182 = vmatprep.subr.mxu0 0.0
  %183 = vmatpush1.msra.mxu0 0.0
  %184 = vmatprep.subr.mxu0 0.0
  %185 = vmatpush1.msra.mxu0 0.0
  %186 = vmatprep.subr.mxu0 0.0
  %187 = vmatpush1.msra.mxu0 0.0
  %188 = vmatprep.subr.mxu0 0.0
  %189 = vmatpush1.msra.mxu0 0.0
  %190 = vmatprep.subr.mxu0 0.0
  %191 = vmatpush1.msra.mxu0 0.0
  %192 = vmatprep.subr.mxu0 0.0
  %193 = vmatpush1.msra.mxu0 0.0
  %194 = vmatprep.mubr.f32.mxu0 0.0
  %195 = vmatmul.mubr.f32.gmra.mrb[0].mxu0 %v106
  %v196 = vpop.f32.mrb[0].mxu0
  %v197 = vadd.f32 %v128, %v196
  %v198 = vpop.f32.mrb[0].mxu0
  %199 = vdwg.mxu0
  %200 = vst [vmem:[%s5] sm:$0xff] %v197
  // Predicated region
  $region22: #{simple_classifier.1} parent=0 // pred_check
    _
  $region23: #{simple_classifier.1} parent=0 // pred_check_branch
    %202 = sbr.rel (0) target = $region25
  $region24: #{simple_classifier.1} parent=0 // pred_region
    _
  $region25: #{simple_classifier.1} parent=0 // pred_fallthru
    _
  // Predicated region
  $region26: #{simple_classifier.1} parent=0 // pred_check
    _
  $region27: #{simple_classifier.1} parent=0 // pred_check_branch
    %204 = sbr.rel (0) target = $region29
  $region28: #{simple_classifier.1} parent=0 // pred_region
    _
  $region29: #{simple_classifier.1} parent=0 // pred_fallthru
    _

</llo_original>
